<compile_context>
chip_gen: v5e
topology: v5e:2x2
jax: 0.10.0
libtpu: 0.0.40
codegen_flags: <defaults>
</compile_context>

<pallas_src>
import jax
import jax.numpy as jnp
from jax import lax
from jax.experimental import pallas as pl
from jax.experimental.pallas import tpu as pltpu

MOMENTUM = 0.999  # MoCo key-encoder momentum (m)


# -----------------------------------------------------------------------------
# Kernel 1: encoders (stand-in) + MLP heads + momentum update + l_pos.
# All operands are small ([N, C] pooled features, head weights, [N, D]
# embeddings), so a single grid-less invocation with fully VMEM-resident blocks
# is appropriate.
# -----------------------------------------------------------------------------
def encode_kernel(
    # ---- inputs ----
    pooled_q_ref, pooled_k_ref,              # [N, Cin] globally pooled images
    w_enc_ref, b_enc_ref,                    # stand-in query encoder [Cin, Din], [1, Din]
    w_enc_k_ref, b_enc_k_ref,                # stand-in key encoder
    w1_ref, b1_ref, w2_ref, b2_ref,          # query head (Linear, ReLU, Linear)
    w1k_ref, b1k_ref, w2k_ref, b2k_ref,      # key head
    # ---- outputs ----
    q_ref, k_ref, l_pos_ref,                 # [N, D], [N, D], [N, 1]
    w_enc_k_out, b_enc_k_out,                # momentum-updated key params
    w1k_out, b1k_out, w2k_out, b2k_out,
):
    f32 = jnp.float32
    m = MOMENTUM

    def encode_and_project(x, w_enc, b_enc, w1, b1, w2, b2):
        feat = jnp.dot(x, w_enc, preferred_element_type=f32) + b_enc
        h = jnp.maximum(jnp.dot(feat, w1, preferred_element_type=f32) + b1, 0.0)
        z = jnp.dot(h, w2, preferred_element_type=f32) + b2
        nrm = jnp.sqrt(jnp.sum(z * z, axis=1, keepdims=True))
        return z / jnp.maximum(nrm, 1e-12)          # F.normalize(dim=1)

    # -------- query branch: q = head(encoder(im_q)) --------
    q = encode_and_project(pooled_q_ref[...], w_enc_ref[...], b_enc_ref[...],
                           w1_ref[...], b1_ref[...], w2_ref[...], b2_ref[...])

    # -------- momentum update of key encoder / head (torch.no_grad()) --------
    w_enc_k = m * w_enc_k_ref[...] + (1.0 - m) * w_enc_ref[...]
    b_enc_k = m * b_enc_k_ref[...] + (1.0 - m) * b_enc_ref[...]
    w1k = m * w1k_ref[...] + (1.0 - m) * w1_ref[...]
    b1k = m * b1k_ref[...] + (1.0 - m) * b1_ref[...]
    w2k = m * w2k_ref[...] + (1.0 - m) * w2_ref[...]
    b2k = m * b2k_ref[...] + (1.0 - m) * b2_ref[...]
    w_enc_k_out[...] = w_enc_k
    b_enc_k_out[...] = b_enc_k
    w1k_out[...] = w1k
    b1k_out[...] = b1k
    w2k_out[...] = w2k
    b2k_out[...] = b2k

    # -------- key branch: k = head_k(encoder_k(im_k)) (updated params) --------
    k = encode_and_project(pooled_k_ref[...], w_enc_k, b_enc_k, w1k, b1k, w2k, b2k)

    q_ref[...] = q
    k_ref[...] = k
    l_pos_ref[...] = jnp.sum(q * k, axis=1, keepdims=True)   # einsum('nc,nc->n')


# -----------------------------------------------------------------------------
# Kernel 2: l_neg = q @ queue, tiled over the queue length K.
# q stays resident (index_map always block 0); queue / logits tiles stream
# through VMEM with BlockSpec double buffering.  Output tiles are lane-dense
# (width TK, a multiple of 128) so stores are unmasked vst.
# -----------------------------------------------------------------------------
def l_neg_kernel(q_ref, queue_ref, out_ref):
    out_ref[...] = jnp.dot(q_ref[...], queue_ref[...],
                           preferred_element_type=jnp.float32)


def _pick_queue_tile(k_cols, requested=None, cap=2048):
    """Largest lane-aligned (multiple of 128) tile width dividing K, capped so
    the double-buffered (D, TK) queue + (N, TK) logits tiles stay well inside
    the default scoped-VMEM limit on every TPU generation (v5e/v6e/v7x)."""
    if requested is not None:
        assert k_cols % requested == 0
        return requested
    if k_cols % 128 != 0:
        return k_cols                      # tiny / unaligned queue: single block
    tk = 128
    while tk * 2 <= min(k_cols, cap) and k_cols % (tk * 2) == 0:
        tk *= 2
    return tk


def moco_forward(im_q, im_k, params, queue, queue_ptr, *, queue_tile=None):
    """Returns (logits, labels, new_key_params, new_queue, new_queue_ptr)."""
    N, C, H, W = im_q.shape
    D, K = queue.shape
    # Same precondition as PyTorch MoCo._dequeue_and_enqueue.
    assert K % N == 0, "MoCo requires K % batch_size == 0"

    # TODO(synk): the ResNet-50 backbone (encoder with fc=Identity) is replaced
    # by a deterministic stand-in: global average pool + linear projection.
    pooled_q = jnp.mean(im_q.reshape(N, C, H * W).astype(jnp.float32), axis=2)
    pooled_k = jnp.mean(im_k.reshape(N, C, H * W).astype(jnp.float32), axis=2)

    f32 = jnp.float32
    vmem = pl.BlockSpec(memory_space=pltpu.MemorySpace.VMEM)

    # ---------------- kernel 1: encode / heads / momentum / l_pos ----------------
    enc_out_shape = (
        jax.ShapeDtypeStruct((N, D), f32),                     # q
        jax.ShapeDtypeStruct((N, D), f32),                     # k
        jax.ShapeDtypeStruct((N, 1), f32),                     # l_pos
        jax.ShapeDtypeStruct(params["w_enc_k"].shape, f32),
        jax.ShapeDtypeStruct(params["b_enc_k"].shape, f32),
        jax.ShapeDtypeStruct(params["w1_k"].shape, f32),
        jax.ShapeDtypeStruct(params["b1_k"].shape, f32),
        jax.ShapeDtypeStruct(params["w2_k"].shape, f32),
        jax.ShapeDtypeStruct(params["b2_k"].shape, f32),
    )
    encode = pl.pallas_call(
        encode_kernel,
        out_shape=enc_out_shape,
        in_specs=[vmem] * 14,
        out_specs=tuple([vmem] * 9),
    )
    (q, k, l_pos, w_enc_k, b_enc_k, w1_k, b1_k, w2_k, b2_k) = encode(
        pooled_q, pooled_k,
        params["w_enc"], params["b_enc"], params["w_enc_k"], params["b_enc_k"],
        params["w1"], params["b1"], params["w2"], params["b2"],
        params["w1_k"], params["b1_k"], params["w2_k"], params["b2_k"],
    )

    # ---------------- kernel 2: l_neg = q @ queue, K-tiled ----------------
    tk = _pick_queue_tile(K, queue_tile)
    # Note: on v5e the queue (and q) can be passed in bf16 to halve the
    # dominant HBM stream; accumulation stays f32 via preferred_element_type.
    l_neg = pl.pallas_call(
        l_neg_kernel,
        out_shape=jax.ShapeDtypeStruct((N, K), f32),
        grid=(K // tk,),
        in_specs=[
            pl.BlockSpec((N, D), lambda j: (0, 0)),      # q: resident across tiles
            pl.BlockSpec((D, tk), lambda j: (0, j)),     # streamed queue tile
        ],
        out_specs=pl.BlockSpec((N, tk), lambda j: (0, j)),   # lane-dense logits tile
        compiler_params=pltpu.CompilerParams(
            dimension_semantics=("parallel",)),          # v7x megacore sharding
    )(q, queue)

    # Lane-dense kernel outputs; the [l_pos | l_neg] concatenation is XLA-side.
    logits = jnp.concatenate([l_pos, l_neg], axis=1)
    labels = jnp.zeros((N,), dtype=jnp.int32)

    # ---------------- dequeue & enqueue: queue[:, ptr:ptr+N] = k.T ----------------
    # Only the D x N column window is written (vs. the previous one-hot MXU
    # scatter + full [D, K] rewrite).
    # TODO(synk): at production scale fuse this as an in-place windowed DMA with
    # input_output_aliases (kv-cache style, donated queue buffer); also, the
    # PyTorch module all-gathers keys across devices before enqueue — here only
    # the local batch is enqueued (single device).
    ptr = queue_ptr[0]
    new_queue = lax.dynamic_update_slice(queue, jnp.transpose(k), (0, ptr))
    new_ptr = (queue_ptr + N) % K

    new_key_params = dict(w_enc_k=w_enc_k, b_enc_k=b_enc_k,
                          w1_k=w1_k, b1_k=b1_k, w2_k=w2_k, b2_k=b2_k)
    return logits, labels, new_key_params, new_queue, new_ptr


def _reference_forward(im_q, im_k, params, queue, queue_ptr):
    """Pure-JAX reference mirroring MoCo.forward (for a correctness check)."""
    m = MOMENTUM

    def enc_head(im, w_enc, b_enc, w1, b1, w2, b2):
        pooled = jnp.mean(im.reshape(im.shape[0], im.shape[1], -1), axis=2)
        feat = pooled @ w_enc + b_enc
        h = jnp.maximum(feat @ w1 + b1, 0.0)
        z = h @ w2 + b2
        nrm = jnp.sqrt(jnp.sum(z * z, axis=1, keepdims=True))
        return z / jnp.maximum(nrm, 1e-12)

    q = enc_head(im_q, params["w_enc"], params["b_enc"],
                 params["w1"], params["b1"], params["w2"], params["b2"])
    upd = lambda pk, p: m * pk + (1.0 - m) * p
    kp = dict(w_enc=upd(params["w_enc_k"], params["w_enc"]),
              b_enc=upd(params["b_enc_k"], params["b_enc"]),
              w1=upd(params["w1_k"], params["w1"]), b1=upd(params["b1_k"], params["b1"]),
              w2=upd(params["w2_k"], params["w2"]), b2=upd(params["b2_k"], params["b2"]))
    k = enc_head(im_k, kp["w_enc"], kp["b_enc"], kp["w1"], kp["b1"], kp["w2"], kp["b2"])
    l_pos = jnp.sum(q * k, axis=1, keepdims=True)
    l_neg = q @ queue
    logits = jnp.concatenate([l_pos, l_neg], axis=1)
    new_queue = lax.dynamic_update_slice(queue, k.T, (0, queue_ptr[0]))
    return logits, new_queue, kp


if __name__ == "__main__":
    # Small synthetic config (real module: dim_in=2048, dim=128, K=65536, N=256).
    N, C, H, W = 8, 4, 16, 16        # batch of NCHW images
    DIM_IN, DIM, K = 32, 16, 512     # K % batch == 0 (as required by MoCo)

    key = jax.random.PRNGKey(0)
    ks = jax.random.split(key, 10)
    im_q = jax.random.normal(ks[0], (N, C, H, W), jnp.float32)
    im_k = jax.random.normal(ks[1], (N, C, H, W), jnp.float32)

    w_enc = jax.random.normal(ks[2], (C, DIM_IN), jnp.float32) * 0.1
    b_enc = jax.random.normal(ks[3], (1, DIM_IN), jnp.float32) * 0.1
    w1 = jax.random.normal(ks[4], (DIM_IN, DIM), jnp.float32) * 0.1
    b1 = jax.random.normal(ks[5], (1, DIM), jnp.float32) * 0.1
    w2 = jax.random.normal(ks[6], (DIM, DIM), jnp.float32) * 0.1
    b2 = jax.random.normal(ks[7], (1, DIM), jnp.float32) * 0.1

    # Key encoder/head initialized as copies of the query ones (param_k.copy_(param)).
    params = dict(
        w_enc=w_enc, b_enc=b_enc, w1=w1, b1=b1, w2=w2, b2=b2,
        w_enc_k=w_enc, b_enc_k=b_enc, w1_k=w1, b1_k=b1, w2_k=w2, b2_k=b2,
    )

    # Queue: randn(dim, K), L2-normalized along dim 0.
    queue = jax.random.normal(ks[8], (DIM, K), jnp.float32)
    queue = queue / jnp.maximum(
        jnp.sqrt(jnp.sum(queue * queue, axis=0, keepdims=True)), 1e-12)
    queue_ptr = jnp.zeros((1,), dtype=jnp.int32)

    logits, labels, new_key_params, new_queue, new_ptr = moco_forward(
        im_q, im_k, params, queue, queue_ptr, queue_tile=128)   # grid=(4,) over K
    jax.block_until_ready((logits, labels, new_key_params, new_queue, new_ptr))

    # Lightweight correctness check against a pure-JAX reference.
    ref_logits, ref_queue, ref_kp = _reference_forward(im_q, im_k, params, queue, queue_ptr)
    assert logits.shape == (N, 1 + K) and labels.shape == (N,)
    assert jnp.allclose(logits, ref_logits, rtol=2e-3, atol=2e-3)
    assert jnp.allclose(new_queue, ref_queue, rtol=2e-3, atol=2e-3)
    assert jnp.allclose(new_key_params["w1_k"], ref_kp["w1"], rtol=1e-5, atol=1e-5)
    assert int(new_ptr[0]) == (0 + N) % K

    print("KERNEL_OK")
</pallas_src>

<mosaic_0001>
module attributes {stable_mosaic.version = 11 : i64} {
  func.func @encode_kernel(%arg0: memref<8x4xf32, #tpu.memory_space<vmem>>, %arg1: memref<8x4xf32, #tpu.memory_space<vmem>>, %arg2: memref<4x32xf32, #tpu.memory_space<vmem>>, %arg3: memref<1x32xf32, #tpu.memory_space<vmem>>, %arg4: memref<4x32xf32, #tpu.memory_space<vmem>>, %arg5: memref<1x32xf32, #tpu.memory_space<vmem>>, %arg6: memref<32x16xf32, #tpu.memory_space<vmem>>, %arg7: memref<1x16xf32, #tpu.memory_space<vmem>>, %arg8: memref<16x16xf32, #tpu.memory_space<vmem>>, %arg9: memref<1x16xf32, #tpu.memory_space<vmem>>, %arg10: memref<32x16xf32, #tpu.memory_space<vmem>>, %arg11: memref<1x16xf32, #tpu.memory_space<vmem>>, %arg12: memref<16x16xf32, #tpu.memory_space<vmem>>, %arg13: memref<1x16xf32, #tpu.memory_space<vmem>>, %arg14: memref<8x16xf32, #tpu.memory_space<vmem>>, %arg15: memref<8x16xf32, #tpu.memory_space<vmem>>, %arg16: memref<8x1xf32, #tpu.memory_space<vmem>>, %arg17: memref<4x32xf32, #tpu.memory_space<vmem>>, %arg18: memref<1x32xf32, #tpu.memory_space<vmem>>, %arg19: memref<32x16xf32, #tpu.memory_space<vmem>>, %arg20: memref<1x16xf32, #tpu.memory_space<vmem>>, %arg21: memref<16x16xf32, #tpu.memory_space<vmem>>, %arg22: memref<1x16xf32, #tpu.memory_space<vmem>>) attributes {dimension_semantics = [], scalar_prefetch = 0 : i64, scratch_operands = 0 : i64, tpu.core_type = #tpu.core_type<tc>} {
    %c0 = arith.constant 0 : index
    %c0_0 = arith.constant 0 : index
    %0 = vector.load %arg0[%c0, %c0_0] : memref<8x4xf32, #tpu.memory_space<vmem>>, vector<8x4xf32>
    %c0_1 = arith.constant 0 : index
    %c0_2 = arith.constant 0 : index
    %1 = vector.load %arg2[%c0_1, %c0_2] : memref<4x32xf32, #tpu.memory_space<vmem>>, vector<4x32xf32>
    %c0_3 = arith.constant 0 : index
    %c0_4 = arith.constant 0 : index
    %2 = vector.load %arg3[%c0_3, %c0_4] : memref<1x32xf32, #tpu.memory_space<vmem>>, vector<1x32xf32>
    %c0_5 = arith.constant 0 : index
    %c0_6 = arith.constant 0 : index
    %3 = vector.load %arg6[%c0_5, %c0_6] : memref<32x16xf32, #tpu.memory_space<vmem>>, vector<32x16xf32>
    %c0_7 = arith.constant 0 : index
    %c0_8 = arith.constant 0 : index
    %4 = vector.load %arg7[%c0_7, %c0_8] : memref<1x16xf32, #tpu.memory_space<vmem>>, vector<1x16xf32>
    %c0_9 = arith.constant 0 : index
    %c0_10 = arith.constant 0 : index
    %5 = vector.load %arg8[%c0_9, %c0_10] : memref<16x16xf32, #tpu.memory_space<vmem>>, vector<16x16xf32>
    %c0_11 = arith.constant 0 : index
    %c0_12 = arith.constant 0 : index
    %6 = vector.load %arg9[%c0_11, %c0_12] : memref<1x16xf32, #tpu.memory_space<vmem>>, vector<1x16xf32>
    %cst = arith.constant dense<0.000000e+00> : vector<8x32xf32>
    %7 = tpu.matmul %0, %1, %cst {dimension_numbers = #tpu.dot_dimension_numbers<[1], [0], [0], [1], [0, 0, 1, 1], [], []>} : vector<8x4xf32>, vector<4x32xf32>, vector<8x32xf32> -> vector<8x32xf32>
    %8 = vector.broadcast %2 : vector<1x32xf32> to vector<8x32xf32>
    %9 = arith.addf %7, %8 : vector<8x32xf32>
    %cst_13 = arith.constant dense<0.000000e+00> : vector<8x16xf32>
    %10 = tpu.matmul %9, %3, %cst_13 {dimension_numbers = #tpu.dot_dimension_numbers<[1], [0], [0], [1], [0, 0, 1, 1], [], []>} : vector<8x32xf32>, vector<32x16xf32>, vector<8x16xf32> -> vector<8x16xf32>
    %11 = vector.broadcast %4 : vector<1x16xf32> to vector<8x16xf32>
    %12 = arith.addf %10, %11 : vector<8x16xf32>
    %cst_14 = arith.constant 0.000000e+00 : f32
    %13 = vector.broadcast %cst_14 : f32 to vector<8x16xf32>
    %14 = arith.maximumf %12, %13 : vector<8x16xf32>
    %cst_15 = arith.constant dense<0.000000e+00> : vector<8x16xf32>
    %15 = tpu.matmul %14, %5, %cst_15 {dimension_numbers = #tpu.dot_dimension_numbers<[1], [0], [0], [1], [0, 0, 1, 1], [], []>} : vector<8x16xf32>, vector<16x16xf32>, vector<8x16xf32> -> vector<8x16xf32>
    %16 = vector.broadcast %6 : vector<1x16xf32> to vector<8x16xf32>
    %17 = arith.addf %15, %16 : vector<8x16xf32>
    %18 = arith.mulf %17, %17 : vector<8x16xf32>
    %cst_16 = arith.constant dense<0.000000e+00> : vector<8xf32>
    %19 = vector.multi_reduction <add>, %18, %cst_16 [1] : vector<8x16xf32> to vector<8xf32>
    %20 = vector.shape_cast %19 : vector<8xf32> to vector<8x1xf32>
    %21 = math.sqrt %20 : vector<8x1xf32>
    %cst_17 = arith.constant 9.99999996E-13 : f32
    %22 = vector.broadcast %cst_17 : f32 to vector<8x1xf32>
    %23 = arith.maximumf %21, %22 : vector<8x1xf32>
    %24 = vector.broadcast %23 : vector<8x1xf32> to vector<8x16xf32>
    %25 = arith.divf %17, %24 : vector<8x16xf32>
    %c0_18 = arith.constant 0 : index
    %c0_19 = arith.constant 0 : index
    %26 = vector.load %arg4[%c0_18, %c0_19] : memref<4x32xf32, #tpu.memory_space<vmem>>, vector<4x32xf32>
    %cst_20 = arith.constant 9.990000e-01 : f32
    %27 = vector.broadcast %cst_20 : f32 to vector<4x32xf32>
    %28 = arith.mulf %27, %26 : vector<4x32xf32>
    %c0_21 = arith.constant 0 : index
    %c0_22 = arith.constant 0 : index
    %29 = vector.load %arg2[%c0_21, %c0_22] : memref<4x32xf32, #tpu.memory_space<vmem>>, vector<4x32xf32>
    %cst_23 = arith.constant 1.000000e-03 : f32
    %30 = vector.broadcast %cst_23 : f32 to vector<4x32xf32>
    %31 = arith.mulf %30, %29 : vector<4x32xf32>
    %32 = arith.addf %28, %31 : vector<4x32xf32>
    %c0_24 = arith.constant 0 : index
    %c0_25 = arith.constant 0 : index
    %33 = vector.load %arg5[%c0_24, %c0_25] : memref<1x32xf32, #tpu.memory_space<vmem>>, vector<1x32xf32>
    %cst_26 = arith.constant 9.990000e-01 : f32
    %34 = vector.broadcast %cst_26 : f32 to vector<1x32xf32>
    %35 = arith.mulf %34, %33 : vector<1x32xf32>
    %c0_27 = arith.constant 0 : index
    %c0_28 = arith.constant 0 : index
    %36 = vector.load %arg3[%c0_27, %c0_28] : memref<1x32xf32, #tpu.memory_space<vmem>>, vector<1x32xf32>
    %cst_29 = arith.constant 1.000000e-03 : f32
    %37 = vector.broadcast %cst_29 : f32 to vector<1x32xf32>
    %38 = arith.mulf %37, %36 : vector<1x32xf32>
    %39 = arith.addf %35, %38 : vector<1x32xf32>
    %c0_30 = arith.constant 0 : index
    %c0_31 = arith.constant 0 : index
    %40 = vector.load %arg10[%c0_30, %c0_31] : memref<32x16xf32, #tpu.memory_space<vmem>>, vector<32x16xf32>
    %cst_32 = arith.constant 9.990000e-01 : f32
    %41 = vector.broadcast %cst_32 : f32 to vector<32x16xf32>
    %42 = arith.mulf %41, %40 : vector<32x16xf32>
    %c0_33 = arith.constant 0 : index
    %c0_34 = arith.constant 0 : index
    %43 = vector.load %arg6[%c0_33, %c0_34] : memref<32x16xf32, #tpu.memory_space<vmem>>, vector<32x16xf32>
    %cst_35 = arith.constant 1.000000e-03 : f32
    %44 = vector.broadcast %cst_35 : f32 to vector<32x16xf32>
    %45 = arith.mulf %44, %43 : vector<32x16xf32>
    %46 = arith.addf %42, %45 : vector<32x16xf32>
    %c0_36 = arith.constant 0 : index
    %c0_37 = arith.constant 0 : index
    %47 = vector.load %arg11[%c0_36, %c0_37] : memref<1x16xf32, #tpu.memory_space<vmem>>, vector<1x16xf32>
    %cst_38 = arith.constant 9.990000e-01 : f32
    %48 = vector.broadcast %cst_38 : f32 to vector<1x16xf32>
    %49 = arith.mulf %48, %47 : vector<1x16xf32>
    %c0_39 = arith.constant 0 : index
    %c0_40 = arith.constant 0 : index
    %50 = vector.load %arg7[%c0_39, %c0_40] : memref<1x16xf32, #tpu.memory_space<vmem>>, vector<1x16xf32>
    %cst_41 = arith.constant 1.000000e-03 : f32
    %51 = vector.broadcast %cst_41 : f32 to vector<1x16xf32>
    %52 = arith.mulf %51, %50 : vector<1x16xf32>
    %53 = arith.addf %49, %52 : vector<1x16xf32>
    %c0_42 = arith.constant 0 : index
    %c0_43 = arith.constant 0 : index
    %54 = vector.load %arg12[%c0_42, %c0_43] : memref<16x16xf32, #tpu.memory_space<vmem>>, vector<16x16xf32>
    %cst_44 = arith.constant 9.990000e-01 : f32
    %55 = vector.broadcast %cst_44 : f32 to vector<16x16xf32>
    %56 = arith.mulf %55, %54 : vector<16x16xf32>
    %c0_45 = arith.constant 0 : index
    %c0_46 = arith.constant 0 : index
    %57 = vector.load %arg8[%c0_45, %c0_46] : memref<16x16xf32, #tpu.memory_space<vmem>>, vector<16x16xf32>
    %cst_47 = arith.constant 1.000000e-03 : f32
    %58 = vector.broadcast %cst_47 : f32 to vector<16x16xf32>
    %59 = arith.mulf %58, %57 : vector<16x16xf32>
    %60 = arith.addf %56, %59 : vector<16x16xf32>
    %c0_48 = arith.constant 0 : index
    %c0_49 = arith.constant 0 : index
    %61 = vector.load %arg13[%c0_48, %c0_49] : memref<1x16xf32, #tpu.memory_space<vmem>>, vector<1x16xf32>
    %cst_50 = arith.constant 9.990000e-01 : f32
    %62 = vector.broadcast %cst_50 : f32 to vector<1x16xf32>
    %63 = arith.mulf %62, %61 : vector<1x16xf32>
    %c0_51 = arith.constant 0 : index
    %c0_52 = arith.constant 0 : index
    %64 = vector.load %arg9[%c0_51, %c0_52] : memref<1x16xf32, #tpu.memory_space<vmem>>, vector<1x16xf32>
    %cst_53 = arith.constant 1.000000e-03 : f32
    %65 = vector.broadcast %cst_53 : f32 to vector<1x16xf32>
    %66 = arith.mulf %65, %64 : vector<1x16xf32>
    %67 = arith.addf %63, %66 : vector<1x16xf32>
    %c0_54 = arith.constant 0 : index
    %c0_55 = arith.constant 0 : index
    %68 = vector.load %arg17[%c0_54, %c0_55] : memref<4x32xf32, #tpu.memory_space<vmem>>, vector<4x32xf32>
    tpu.vector_store %arg17[%c0_54, %c0_55], %32 {strides = array<i32>} : memref<4x32xf32, #tpu.memory_space<vmem>>, vector<4x32xf32>,
    %c0_56 = arith.constant 0 : index
    %c0_57 = arith.constant 0 : index
    %69 = vector.load %arg18[%c0_56, %c0_57] : memref<1x32xf32, #tpu.memory_space<vmem>>, vector<1x32xf32>
    tpu.vector_store %arg18[%c0_56, %c0_57], %39 {strides = array<i32>} : memref<1x32xf32, #tpu.memory_space<vmem>>, vector<1x32xf32>,
    %c0_58 = arith.constant 0 : index
    %c0_59 = arith.constant 0 : index
    %70 = vector.load %arg19[%c0_58, %c0_59] : memref<32x16xf32, #tpu.memory_space<vmem>>, vector<32x16xf32>
    tpu.vector_store %arg19[%c0_58, %c0_59], %46 {strides = array<i32>} : memref<32x16xf32, #tpu.memory_space<vmem>>, vector<32x16xf32>,
    %c0_60 = arith.constant 0 : index
    %c0_61 = arith.constant 0 : index
    %71 = vector.load %arg20[%c0_60, %c0_61] : memref<1x16xf32, #tpu.memory_space<vmem>>, vector<1x16xf32>
    tpu.vector_store %arg20[%c0_60, %c0_61], %53 {strides = array<i32>} : memref<1x16xf32, #tpu.memory_space<vmem>>, vector<1x16xf32>,
    %c0_62 = arith.constant 0 : index
    %c0_63 = arith.constant 0 : index
    %72 = vector.load %arg21[%c0_62, %c0_63] : memref<16x16xf32, #tpu.memory_space<vmem>>, vector<16x16xf32>
    tpu.vector_store %arg21[%c0_62, %c0_63], %60 {strides = array<i32>} : memref<16x16xf32, #tpu.memory_space<vmem>>, vector<16x16xf32>,
    %c0_64 = arith.constant 0 : index
    %c0_65 = arith.constant 0 : index
    %73 = vector.load %arg22[%c0_64, %c0_65] : memref<1x16xf32, #tpu.memory_space<vmem>>, vector<1x16xf32>
    tpu.vector_store %arg22[%c0_64, %c0_65], %67 {strides = array<i32>} : memref<1x16xf32, #tpu.memory_space<vmem>>, vector<1x16xf32>,
    %c0_66 = arith.constant 0 : index
    %c0_67 = arith.constant 0 : index
    %74 = vector.load %arg1[%c0_66, %c0_67] : memref<8x4xf32, #tpu.memory_space<vmem>>, vector<8x4xf32>
    %cst_68 = arith.constant dense<0.000000e+00> : vector<8x32xf32>
    %75 = tpu.matmul %74, %32, %cst_68 {dimension_numbers = #tpu.dot_dimension_numbers<[1], [0], [0], [1], [0, 0, 1, 1], [], []>} : vector<8x4xf32>, vector<4x32xf32>, vector<8x32xf32> -> vector<8x32xf32>
    %76 = vector.broadcast %39 : vector<1x32xf32> to vector<8x32xf32>
    %77 = arith.addf %75, %76 : vector<8x32xf32>
    %cst_69 = arith.constant dense<0.000000e+00> : vector<8x16xf32>
    %78 = tpu.matmul %77, %46, %cst_69 {dimension_numbers = #tpu.dot_dimension_numbers<[1], [0], [0], [1], [0, 0, 1, 1], [], []>} : vector<8x32xf32>, vector<32x16xf32>, vector<8x16xf32> -> vector<8x16xf32>
    %79 = vector.broadcast %53 : vector<1x16xf32> to vector<8x16xf32>
    %80 = arith.addf %78, %79 : vector<8x16xf32>
    %cst_70 = arith.constant 0.000000e+00 : f32
    %81 = vector.broadcast %cst_70 : f32 to vector<8x16xf32>
    %82 = arith.maximumf %80, %81 : vector<8x16xf32>
    %cst_71 = arith.constant dense<0.000000e+00> : vector<8x16xf32>
    %83 = tpu.matmul %82, %60, %cst_71 {dimension_numbers = #tpu.dot_dimension_numbers<[1], [0], [0], [1], [0, 0, 1, 1], [], []>} : vector<8x16xf32>, vector<16x16xf32>, vector<8x16xf32> -> vector<8x16xf32>
    %84 = vector.broadcast %67 : vector<1x16xf32> to vector<8x16xf32>
    %85 = arith.addf %83, %84 : vector<8x16xf32>
    %86 = arith.mulf %85, %85 : vector<8x16xf32>
    %cst_72 = arith.constant dense<0.000000e+00> : vector<8xf32>
    %87 = vector.multi_reduction <add>, %86, %cst_72 [1] : vector<8x16xf32> to vector<8xf32>
    %88 = vector.shape_cast %87 : vector<8xf32> to vector<8x1xf32>
    %89 = math.sqrt %88 : vector<8x1xf32>
    %cst_73 = arith.constant 9.99999996E-13 : f32
    %90 = vector.broadcast %cst_73 : f32 to vector<8x1xf32>
    %91 = arith.maximumf %89, %90 : vector<8x1xf32>
    %92 = vector.broadcast %91 : vector<8x1xf32> to vector<8x16xf32>
    %93 = arith.divf %85, %92 : vector<8x16xf32>
    %c0_74 = arith.constant 0 : index
    %c0_75 = arith.constant 0 : index
    %94 = vector.load %arg14[%c0_74, %c0_75] : memref<8x16xf32, #tpu.memory_space<vmem>>, vector<8x16xf32>
    tpu.vector_store %arg14[%c0_74, %c0_75], %25 {strides = array<i32>} : memref<8x16xf32, #tpu.memory_space<vmem>>, vector<8x16xf32>,
    %c0_76 = arith.constant 0 : index
    %c0_77 = arith.constant 0 : index
    %95 = vector.load %arg15[%c0_76, %c0_77] : memref<8x16xf32, #tpu.memory_space<vmem>>, vector<8x16xf32>
    tpu.vector_store %arg15[%c0_76, %c0_77], %93 {strides = array<i32>} : memref<8x16xf32, #tpu.memory_space<vmem>>, vector<8x16xf32>,
    %96 = arith.mulf %25, %93 : vector<8x16xf32>
    %cst_78 = arith.constant dense<0.000000e+00> : vector<8xf32>
    %97 = vector.multi_reduction <add>, %96, %cst_78 [1] : vector<8x16xf32> to vector<8xf32>
    %98 = vector.shape_cast %97 : vector<8xf32> to vector<8x1xf32>
    %c0_79 = arith.constant 0 : index
    %c0_80 = arith.constant 0 : index
    %99 = vector.load %arg16[%c0_79, %c0_80] : memref<8x1xf32, #tpu.memory_space<vmem>>, vector<8x1xf32>
    tpu.vector_store %arg16[%c0_79, %c0_80], %98 {strides = array<i32>} : memref<8x1xf32, #tpu.memory_space<vmem>>, vector<8x1xf32>,
    return
  }
}

</mosaic_0001>

<llo_original>
// kernel: tpu_custom_call.1
$region0: #{tpu_custom_call.1}
  #allocation0 [shape = 'u32[]', space=smem, size = 0x4, offset = 0x4, fixed_abs, tag = 'smem constant byte address 0x4 - core index']
  #allocation1 [shape = 'u32[72,128]{1,0:T(1,128)}', space=vmem, size = 0x9000, scoped, tag = 'internal scratch']
  %s0 = inlined_call_operand.vmem [shape: f32[8,4], index: 0, kind: input, shape index: {}]
  %s1 = inlined_call_operand.vmem [shape: f32[8,4], index: 1, kind: input, shape index: {}]
  %s2 = inlined_call_operand.vmem [shape: f32[4,32], index: 2, kind: input, shape index: {}]
  %s3 = inlined_call_operand.vmem [shape: f32[1,32], index: 3, kind: input, shape index: {}]
  %s4 = inlined_call_operand.vmem [shape: f32[4,32], index: 4, kind: input, shape index: {}]
  %s5 = inlined_call_operand.vmem [shape: f32[1,32], index: 5, kind: input, shape index: {}]
  %s6 = inlined_call_operand.vmem [shape: f32[32,16], index: 6, kind: input, shape index: {}]
  %s7 = inlined_call_operand.vmem [shape: f32[1,16], index: 7, kind: input, shape index: {}]
  %s8 = inlined_call_operand.vmem [shape: f32[16,16], index: 8, kind: input, shape index: {}]
  %s9 = inlined_call_operand.vmem [shape: f32[1,16], index: 9, kind: input, shape index: {}]
  %s10 = inlined_call_operand.vmem [shape: f32[32,16], index: 10, kind: input, shape index: {}]
  %s11 = inlined_call_operand.vmem [shape: f32[1,16], index: 11, kind: input, shape index: {}]
  %s12 = inlined_call_operand.vmem [shape: f32[16,16], index: 12, kind: input, shape index: {}]
  %s13 = inlined_call_operand.vmem [shape: f32[1,16], index: 13, kind: input, shape index: {}]
  %s14 = inlined_call_operand.hbm [shape: f32[8,16], index: 14, kind: output, shape index: {0}]
  %s15 = inlined_call_operand.hbm [shape: f32[8,16], index: 15, kind: output, shape index: {1}]
  %s16 = inlined_call_operand.vmem [shape: f32[8,1], index: 16, kind: output, shape index: {2}]
  %s17 = inlined_call_operand.hbm [shape: f32[4,32], index: 17, kind: output, shape index: {3}]
  %s18 = inlined_call_operand.hbm [shape: f32[1,32], index: 18, kind: output, shape index: {4}]
  %s19 = inlined_call_operand.vmem [shape: f32[32,16], index: 19, kind: output, shape index: {5}]
  %s20 = inlined_call_operand.hbm [shape: f32[1,16], index: 20, kind: output, shape index: {6}]
  %s21 = inlined_call_operand.hbm [shape: f32[16,16], index: 21, kind: output, shape index: {7}]
  %s22 = inlined_call_operand.hbm [shape: f32[1,16], index: 22, kind: output, shape index: {8}]
  %23 = xla_tuple %s14, %s15, %s16, %s17, %s18, %s19, %s20, %s21, %s22
  %s24 = sld [smem:[#allocation0]]
  $region130: #{tpu_custom_call.1} parent=0
    _
  %s26 = ssub.s32 1, %s24
  %s27 = scalar_select 0, %s26, %s24
  $region1: #{tpu_custom_call.1} parent=0
    #allocation2 [shape = 'u8[4096]{0}', space=vmem, size = 0x1000, scoped, tag = 'output window, operand 0, single buffered']
    #allocation3 [shape = 's32[1]{0}', space=sflag, size = 0x4, scoped, tag = 'scoped memory for tpu_custom_call.1']
    #allocation4 [shape = 'u8[4096]{0}', space=vmem, size = 0x1000, scoped, tag = 'output window, operand 1, single buffered']
    #allocation5 [shape = 's32[1]{0}', space=sflag, size = 0x4, scoped, tag = 'scoped memory for tpu_custom_call.1']
    #allocation6 [shape = 'u8[2048]{0}', space=vmem, size = 0x800, scoped, tag = 'output window, operand 3, single buffered']
    #allocation7 [shape = 'u8[512]{0}', space=vmem, size = 0x400, scoped, tag = 'output window, operand 4, single buffered']
    #allocation8 [shape = 's32[1]{0}', space=sflag, size = 0x4, scoped, tag = 'scoped memory for tpu_custom_call.1']
    #allocation9 [shape = 'u8[512]{0}', space=vmem, size = 0x400, scoped, tag = 'output window, operand 6, single buffered']
    #allocation10 [shape = 'u8[8192]{0}', space=vmem, size = 0x2000, scoped, tag = 'output window, operand 7, single buffered']
    #allocation11 [shape = 's32[1]{0}', space=sflag, size = 0x4, scoped, tag = 'scoped memory for tpu_custom_call.1']
    #allocation12 [shape = 'u8[512]{0}', space=vmem, size = 0x400, scoped, tag = 'output window, operand 8, single buffered']
    %28 = vsyncpa [#allocation3], 0
    %29 = vsyncpa [#allocation5], 0
    %30 = vsyncpa [#allocation8], 0
    %31 = vsyncpa [#allocation11], 0
    // Predicated region
    $region2: #{tpu_custom_call.1} parent=1 // pred_check
      _
    $region3: #{tpu_custom_call.1} parent=1 // pred_check_branch
      %33 = sbr.rel (0) target = $region5
    $region4: #{tpu_custom_call.1} parent=1 // pred_region
      _
    $region5: #{tpu_custom_call.1} parent=1 // pred_fallthru
      _
    // Predicated region
    $region6: #{tpu_custom_call.1} parent=1 // pred_check
      _
    $region7: #{tpu_custom_call.1} parent=1 // pred_check_branch
      %35 = sbr.rel (0) target = $region9
    $region8: #{tpu_custom_call.1} parent=1 // pred_region
      _
    $region9: #{tpu_custom_call.1} parent=1 // pred_fallthru
      _
    // Predicated region
    $region10: #{tpu_custom_call.1} parent=1 // pred_check
      _
    $region11: #{tpu_custom_call.1} parent=1 // pred_check_branch
      %37 = sbr.rel (0) target = $region13
    $region12: #{tpu_custom_call.1} parent=1 // pred_region
      _
    $region13: #{tpu_custom_call.1} parent=1 // pred_fallthru
      _
    // Predicated region
    $region14: #{tpu_custom_call.1} parent=1 // pred_check
      _
    $region15: #{tpu_custom_call.1} parent=1 // pred_check_branch
      %39 = sbr.rel (0) target = $region17
    $region16: #{tpu_custom_call.1} parent=1 // pred_region
      _
    $region17: #{tpu_custom_call.1} parent=1 // pred_fallthru
      _
    // Predicated region
    $region18: #{tpu_custom_call.1} parent=1 // pred_check
      _
    $region19: #{tpu_custom_call.1} parent=1 // pred_check_branch
      %41 = sbr.rel (0) target = $region21
    $region20: #{tpu_custom_call.1} parent=1 // pred_region
      _
    $region21: #{tpu_custom_call.1} parent=1 // pred_fallthru
      _
    // Predicated region
    $region22: #{tpu_custom_call.1} parent=1 // pred_check
      _
    $region23: #{tpu_custom_call.1} parent=1 // pred_check_branch
      %43 = sbr.rel (0) target = $region25
    $region24: #{tpu_custom_call.1} parent=1 // pred_region
      _
    $region25: #{tpu_custom_call.1} parent=1 // pred_fallthru
      _
    // Predicated region
    $region26: #{tpu_custom_call.1} parent=1 // pred_check
      _
    $region27: #{tpu_custom_call.1} parent=1 // pred_check_branch
      %45 = sbr.rel (0) target = $region29
    $region28: #{tpu_custom_call.1} parent=1 // pred_region
      _
    $region29: #{tpu_custom_call.1} parent=1 // pred_fallthru
      _
    // Predicated region
    $region30: #{tpu_custom_call.1} parent=1 // pred_check
      _
    $region31: #{tpu_custom_call.1} parent=1 // pred_check_branch
      %47 = sbr.rel (0) target = $region33
    $region32: #{tpu_custom_call.1} parent=1 // pred_region
      _
    $region33: #{tpu_custom_call.1} parent=1 // pred_fallthru
      _
    // Predicated region
    $region34: #{tpu_custom_call.1} parent=1 // pred_check
      _
    $region35: #{tpu_custom_call.1} parent=1 // pred_check_branch
      %49 = sbr.rel (0) target = $region37
    $region36: #{tpu_custom_call.1} parent=1 // pred_region
      _
    $region37: #{tpu_custom_call.1} parent=1 // pred_fallthru
      _
    // Predicated region
    $region38: #{tpu_custom_call.1} parent=1 // pred_check
      _
    $region39: #{tpu_custom_call.1} parent=1 // pred_check_branch
      %51 = sbr.rel (0) target = $region41
    $region40: #{tpu_custom_call.1} parent=1 // pred_region
      _
    $region41: #{tpu_custom_call.1} parent=1 // pred_fallthru
      _
    // Predicated region
    $region42: #{tpu_custom_call.1} parent=1 // pred_check
      _
    $region43: #{tpu_custom_call.1} parent=1 // pred_check_branch
      %53 = sbr.rel (0) target = $region45
    $region44: #{tpu_custom_call.1} parent=1 // pred_region
      _
    $region45: #{tpu_custom_call.1} parent=1 // pred_fallthru
      _
    // Predicated region
    $region46: #{tpu_custom_call.1} parent=1 // pred_check
      _
    $region47: #{tpu_custom_call.1} parent=1 // pred_check_branch
      %55 = sbr.rel (0) target = $region49
    $region48: #{tpu_custom_call.1} parent=1 // pred_region
      _
    $region49: #{tpu_custom_call.1} parent=1 // pred_fallthru
      _
    // Predicated region
    $region50: #{tpu_custom_call.1} parent=1 // pred_check
      _
    $region51: #{tpu_custom_call.1} parent=1 // pred_check_branch
      %57 = sbr.rel (0) target = $region53
    $region52: #{tpu_custom_call.1} parent=1 // pred_region
      _
    $region53: #{tpu_custom_call.1} parent=1 // pred_fallthru
      _
    // Predicated region
    $region54: #{tpu_custom_call.1} parent=1 // pred_check
      _
    $region55: #{tpu_custom_call.1} parent=1 // pred_check_branch
      %59 = sbr.rel (0) target = $region57
    $region56: #{tpu_custom_call.1} parent=1 // pred_region
      _
    $region57: #{tpu_custom_call.1} parent=1 // pred_fallthru
      _
    %v60 = vld [vmem:[%s0] sm:$0xff]
    %v61 = vld [vmem:[%s2] sm:$0xf]
    %v62 = vld [vmem:[%s3] sm:$0x1]
    %v63 = vld [vmem:[%s6] sm:$0xff]
    %v64 = vld [vmem:[%s6 + $0x8] sm:$0xff]
    %v65 = vld [vmem:[%s6 + $0x10] sm:$0xff]
    %v66 = vld [vmem:[%s6 + $0x18] sm:$0xff]
    %v67 = vld [vmem:[%s7] sm:$0x1]
    %v68 = vld [vmem:[%s8] sm:$0xff]
    %v69 = vld [vmem:[%s8 + $0x8] sm:$0xff]
    %v70 = vld [vmem:[%s9] sm:$0x1]
    %v72 = vperm.slane %v62, 0
    %vm74 = vcmask 31744
    %v76 = vsel %vm74, %v60, 0
    %vm78 = vcmask 1043456
    %v80 = vsel %vm78, %v61, 0
    %82 = vmatpush.msra.mxu0 0.0
    %83 = vmatpush.msra.mxu0 0.0
    %84 = vmatpush.msra.mxu0 0.0
    %85 = vmatpush.msra.mxu0 0.0
    %86 = vmatpush.msra.mxu0 0.0
    %87 = vmatpush.msra.mxu0 0.0
    %88 = vmatpush.msra.mxu0 0.0
    %89 = vmatpush.msra.mxu0 0.0
    %90 = vmatpush.msra.mxu0 0.0
    %91 = vmatpush.msra.mxu0 0.0
    %92 = vmatpush.msra.mxu0 0.0
    %93 = vmatpush.msra.mxu0 0.0
    %94 = vmatpush.msra.mxu0 0.0
    %95 = vmatpush.msra.mxu0 0.0
    %96 = vmatpush.msra.mxu0 0.0
    %97 = vmatpush.msra.mxu0 %v80
    %98 = vmatmul.f32.gmra.mxu0 %v76
    %v99 = vpop.f32.mrf.mxu0
    %v100 = vadd.f32 %v72, %v99
    %101 = vdwg.mxu0
    %v103 = vperm.slane %v67, 0
    %vm105 = vcmask 261120
    %v107 = vsel %vm105, %v100, 0
    %109 = vmatpush.msra.mxu0 0.0
    %110 = vmatpush.msra.mxu0 0.0
    %111 = vmatpush.msra.mxu0 0.0
    %112 = vmatpush.msra.mxu0 0.0
    %113 = vmatpush.msra.mxu0 0.0
    %114 = vmatpush.msra.mxu0 0.0
    %115 = vmatpush.msra.mxu0 0.0
    %116 = vmatpush.msra.mxu0 0.0
    %117 = vmatpush.msra.mxu0 0.0
    %118 = vmatpush.msra.mxu0 0.0
    %119 = vmatpush.msra.mxu0 0.0
    %120 = vmatpush.msra.mxu0 0.0
    %121 = vmatpush.msra.mxu0 %v66
    %122 = vmatpush.msra.mxu0 %v65
    %123 = vmatpush.msra.mxu0 %v64
    %124 = vmatpush.msra.mxu0 %v63
    %125 = vmatmul.f32.gmra.mxu0 %v107
    %v126 = vpop.f32.mrf.mxu0
    %v127 = vadd.f32 %v103, %v126
    %128 = vdwg.mxu0
    %v129 = vmax.f32 %v127, 0.0
    %v131 = vperm.slane %v70, 0
    %vm133 = vcmask 130048
    %v135 = vsel %vm133, %v129, 0
    %137 = vmatpush.msra.mxu0 0.0
    %138 = vmatpush.msra.mxu0 0.0
    %139 = vmatpush.msra.mxu0 0.0
    %140 = vmatpush.msra.mxu0 0.0
    %141 = vmatpush.msra.mxu0 0.0
    %142 = vmatpush.msra.mxu0 0.0
    %143 = vmatpush.msra.mxu0 0.0
    %144 = vmatpush.msra.mxu0 0.0
    %145 = vmatpush.msra.mxu0 0.0
    %146 = vmatpush.msra.mxu0 0.0
    %147 = vmatpush.msra.mxu0 0.0
    %148 = vmatpush.msra.mxu0 0.0
    %149 = vmatpush.msra.mxu0 0.0
    %150 = vmatpush.msra.mxu0 0.0
    %151 = vmatpush.msra.mxu0 %v69
    %152 = vmatpush.msra.mxu0 %v68
    %153 = vmatmul.f32.gmra.mxu0 %v135
    %v154 = vpop.f32.mrf.mxu0
    %v155 = vadd.f32 %v131, %v154
    %156 = vdwg.mxu0
    %v157 = vmul.f32 %v155, %v155
    %v158 = vsel %vm133, %v157, 0.0
    %159 = vadd.xlane.f32.xlu0 %v158
    %v160 = vpop.xlane.xlu0 %159
    %v161 = vrsqrt.pop %v160
    %v162 = vmul.f32 %v161, %v160
    %v163 = vmul.f32 %v162, %v161
    %v164 = vmul.f32 0.5, %v163
    %v165 = vsub.f32 1.5, %v164
    %v166 = vmul.f32 %v161, %v165
    %v167 = vmul.f32 %v160, %v166
    %vm168 = vcmp.eq.f32.partialorder %v160, inf
    %v169 = vsel %vm168, %v160, %v167
    %vm170 = vcmp.eq.f32.partialorder %v160, 0.0
    %v171 = vand.u32 %v160, 2147483648
    %v172 = vsel %vm170, %v171, %v169
    %v173 = vmax.f32 %v172, 1e-12
    %v174 = vrcp.pop %v173
    %v175 = vmul.f32 %v173, %v174
    %v176 = vsub.f32 1.0, %v175
    %v177 = vmul.f32 %v174, %v176
    %v178 = vadd.f32 %v174, %v177
    %vm179 = vweird.f32 %v173
    %vm180 = vweird.f32 %v174
    %vm181 = vmor %vm179, %vm180
    %v182 = vsel %vm181, %v174, %v178
    %v183 = vand.u32 2147483647, %v173
    %vm184 = vcmp.eq.f32.partialorder %v183, 8.507059e+37
    %v185 = vand.u32 %v173, 2147483648
    %v186 = vor.u32 1.1754944e-38, %v185
    %v187 = vsel %vm184, %v186, %v182
    %v188 = vmul.f32 %v155, %v187
    %v189 = vld [vmem:[%s4] sm:$0xf]
    %v190 = vmul.f32 %v189, 0.999
    %v191 = vmul.f32 %v61, 0.001
    %v192 = vadd.f32 %v190, %v191
    %v193 = vld [vmem:[%s5] sm:$0x1]
    %v194 = vmul.f32 %v193, 0.999
    %v195 = vmul.f32 %v62, 0.001
    %v196 = vadd.f32 %v194, %v195
    %v197 = vld [vmem:[%s10] sm:$0xff]
    %v198 = vld [vmem:[%s10 + $0x8] sm:$0xff]
    %v199 = vld [vmem:[%s10 + $0x10] sm:$0xff]
    %v200 = vld [vmem:[%s10 + $0x18] sm:$0xff]
    %v201 = vmul.f32 %v197, 0.999
    %v202 = vmul.f32 %v198, 0.999
    %v203 = vmul.f32 %v199, 0.999
    %v204 = vmul.f32 %v200, 0.999
    %v205 = vmul.f32 %v63, 0.001
    %v206 = vmul.f32 %v64, 0.001
    %v207 = vmul.f32 %v65, 0.001
    %v208 = vmul.f32 %v66, 0.001
    %v209 = vadd.f32 %v201, %v205
    %v210 = vadd.f32 %v202, %v206
    %v211 = vadd.f32 %v203, %v207
    %v212 = vadd.f32 %v204, %v208
    %v213 = vld [vmem:[%s11] sm:$0x1]
    %v214 = vmul.f32 %v213, 0.999
    %v215 = vmul.f32 %v67, 0.001
    %v216 = vadd.f32 %v214, %v215
    %v217 = vld [vmem:[%s12] sm:$0xff]
    %v218 = vld [vmem:[%s12 + $0x8] sm:$0xff]
    %v219 = vmul.f32 %v217, 0.999
    %v220 = vmul.f32 %v218, 0.999
    %v221 = vmul.f32 %v68, 0.001
    %v222 = vmul.f32 %v69, 0.001
    %v223 = vadd.f32 %v219, %v221
    %v224 = vadd.f32 %v220, %v222
    %v225 = vld [vmem:[%s13] sm:$0x1]
    %v226 = vmul.f32 %v225, 0.999
    %v227 = vmul.f32 %v70, 0.001
    %v228 = vadd.f32 %v226, %v227
    %vm229 = vcmask 257024
    %230 = vst.msk [vmem:[#allocation6] sm:$0xf] %vm229, %v192
    %vm231 = vcmask 253952
    %232 = vst.msk [vmem:[#allocation7] sm:$0x1] %vm231, %v196
    %233 = vst.msk [vmem:[%s19] sm:$0xff] %vm133, %v209
    %234 = vst.msk [vmem:[%s19 + $0x8] sm:$0xff] %vm133, %v210
    %235 = vst.msk [vmem:[%s19 + $0x10] sm:$0xff] %vm133, %v211
    %236 = vst.msk [vmem:[%s19 + $0x18] sm:$0xff] %vm133, %v212
    %vm237 = vcmask 122880
    %238 = vst.msk [vmem:[#allocation9] sm:$0x1] %vm237, %v216
    %239 = vst.msk [vmem:[#allocation10] sm:$0xff] %vm133, %v223
    %240 = vst.msk [vmem:[#allocation10 + $0x8] sm:$0xff] %vm133, %v224
    %241 = vst.msk [vmem:[#allocation12] sm:$0x1] %vm237, %v228
    %v242 = vld [vmem:[%s1] sm:$0xff]
    %v244 = vperm.slane %v196, 0
    %v247 = vsel %vm74, %v242, 0
    %v250 = vsel %vm78, %v192, 0
    %252 = vmatpush.msra.mxu0 0.0
    %253 = vmatpush.msra.mxu0 0.0
    %254 = vmatpush.msra.mxu0 0.0
    %255 = vmatpush.msra.mxu0 0.0
    %256 = vmatpush.msra.mxu0 0.0
    %257 = vmatpush.msra.mxu0 0.0
    %258 = vmatpush.msra.mxu0 0.0
    %259 = vmatpush.msra.mxu0 0.0
    %260 = vmatpush.msra.mxu0 0.0
    %261 = vmatpush.msra.mxu0 0.0
    %262 = vmatpush.msra.mxu0 0.0
    %263 = vmatpush.msra.mxu0 0.0
    %264 = vmatpush.msra.mxu0 0.0
    %265 = vmatpush.msra.mxu0 0.0
    %266 = vmatpush.msra.mxu0 0.0
    %267 = vmatpush.msra.mxu0 %v250
    %268 = vmatmul.f32.gmra.mxu0 %v247
    %v269 = vpop.f32.mrf.mxu0
    %v270 = vadd.f32 %v244, %v269
    %271 = vdwg.mxu0
    %v273 = vperm.slane %v216, 0
    %v276 = vsel %vm105, %v270, 0
    %278 = vmatpush.msra.mxu0 0.0
    %279 = vmatpush.msra.mxu0 0.0
    %280 = vmatpush.msra.mxu0 0.0
    %281 = vmatpush.msra.mxu0 0.0
    %282 = vmatpush.msra.mxu0 0.0
    %283 = vmatpush.msra.mxu0 0.0
    %284 = vmatpush.msra.mxu0 0.0
    %285 = vmatpush.msra.mxu0 0.0
    %286 = vmatpush.msra.mxu0 0.0
    %287 = vmatpush.msra.mxu0 0.0
    %288 = vmatpush.msra.mxu0 0.0
    %289 = vmatpush.msra.mxu0 0.0
    %290 = vmatpush.msra.mxu0 %v212
    %291 = vmatpush.msra.mxu0 %v211
    %292 = vmatpush.msra.mxu0 %v210
    %293 = vmatpush.msra.mxu0 %v209
    %294 = vmatmul.f32.gmra.mxu0 %v276
    %v295 = vpop.f32.mrf.mxu0
    %v296 = vadd.f32 %v273, %v295
    %297 = vdwg.mxu0
    %v298 = vmax.f32 %v296, 0.0
    %v300 = vperm.slane %v228, 0
    %v303 = vsel %vm133, %v298, 0
    %305 = vmatpush.msra.mxu0 0.0
    %306 = vmatpush.msra.mxu0 0.0
    %307 = vmatpush.msra.mxu0 0.0
    %308 = vmatpush.msra.mxu0 0.0
    %309 = vmatpush.msra.mxu0 0.0
    %310 = vmatpush.msra.mxu0 0.0
    %311 = vmatpush.msra.mxu0 0.0
    %312 = vmatpush.msra.mxu0 0.0
    %313 = vmatpush.msra.mxu0 0.0
    %314 = vmatpush.msra.mxu0 0.0
    %315 = vmatpush.msra.mxu0 0.0
    %316 = vmatpush.msra.mxu0 0.0
    %317 = vmatpush.msra.mxu0 0.0
    %318 = vmatpush.msra.mxu0 0.0
    %319 = vmatpush.msra.mxu0 %v224
    %320 = vmatpush.msra.mxu0 %v223
    %321 = vmatmul.f32.gmra.mxu0 %v303
    %v322 = vpop.f32.mrf.mxu0
    %v323 = vadd.f32 %v300, %v322
    %324 = vdwg.mxu0
    %v325 = vmul.f32 %v323, %v323
    %v326 = vsel %vm133, %v325, 0.0
    %327 = vadd.xlane.f32.xlu0 %v326
    %v328 = vpop.xlane.xlu0 %327
    %v329 = vrsqrt.pop %v328
    %v330 = vmul.f32 %v329, %v328
    %v331 = vmul.f32 %v330, %v329
    %v332 = vmul.f32 0.5, %v331
    %v333 = vsub.f32 1.5, %v332
    %v334 = vmul.f32 %v329, %v333
    %v335 = vmul.f32 %v328, %v334
    %vm336 = vcmp.eq.f32.partialorder %v328, inf
    %v337 = vsel %vm336, %v328, %v335
    %vm338 = vcmp.eq.f32.partialorder %v328, 0.0
    %v339 = vand.u32 %v328, 2147483648
    %v340 = vsel %vm338, %v339, %v337
    %v341 = vmax.f32 %v340, 1e-12
    %v342 = vrcp.pop %v341
    %v343 = vmul.f32 %v341, %v342
    %v344 = vsub.f32 1.0, %v343
    %v345 = vmul.f32 %v342, %v344
    %v346 = vadd.f32 %v342, %v345
    %vm347 = vweird.f32 %v341
    %vm348 = vweird.f32 %v342
    %vm349 = vmor %vm347, %vm348
    %v350 = vsel %vm349, %v342, %v346
    %v351 = vand.u32 2147483647, %v341
    %vm352 = vcmp.eq.f32.partialorder %v351, 8.507059e+37
    %v353 = vand.u32 %v341, 2147483648
    %v354 = vor.u32 1.1754944e-38, %v353
    %v355 = vsel %vm352, %v354, %v350
    %v356 = vmul.f32 %v323, %v355
    %357 = vst.msk [vmem:[#allocation2] sm:$0xff] %vm133, %v188
    %358 = vst.msk [vmem:[#allocation4] sm:$0xff] %vm133, %v356
    %v359 = vmul.f32 %v188, %v356
    %v360 = vsel %vm133, %v359, 0.0
    %361 = vadd.xlane.f32.xlu0 %v360
    %v362 = vpop.xlane.xlu0 %361
    %vm363 = vcmask 7168
    %364 = vst.msk [vmem:[%s16] sm:$0xff] %vm363, %v362
    // Predicated region
    $region58: #{tpu_custom_call.1} parent=1 // pred_check
      _
    $region59: #{tpu_custom_call.1} parent=1 // pred_check_branch
      %366 = sbr.rel (0) target = $region61
    $region60: #{tpu_custom_call.1} parent=1 // pred_region
      %368 = vsyncadd [#allocation3], 0
      %s370 = sshll.u32 [#allocation2], 4
      %s371 = int_to_ptr.vmem [resolvable:$true] %s370
      %s372 = sshll.u32 %s14, 4
      %s373 = int_to_ptr.hbm [resolvable:$true] %s372
      %375 = dma.vmem_to_hbm [thread:$0]  %s371, 128, %s373, [#allocation3]
    $region61: #{tpu_custom_call.1} parent=1 // pred_fallthru
      _
    // Predicated region
    $region62: #{tpu_custom_call.1} parent=1 // pred_check
      _
    $region63: #{tpu_custom_call.1} parent=1 // pred_check_branch
      %377 = sbr.rel (0) target = $region65
    $region64: #{tpu_custom_call.1} parent=1 // pred_region
      %379 = vsyncadd [#allocation5], 0
      %s381 = sshll.u32 [#allocation4], 4
      %s382 = int_to_ptr.vmem [resolvable:$true] %s381
      %s383 = sshll.u32 %s15, 4
      %s384 = int_to_ptr.hbm [resolvable:$true] %s383
      %386 = dma.vmem_to_hbm [thread:$0]  %s382, 128, %s384, [#allocation5]
    $region65: #{tpu_custom_call.1} parent=1 // pred_fallthru
      _
    // Predicated region
    $region66: #{tpu_custom_call.1} parent=1 // pred_check
      _
    $region67: #{tpu_custom_call.1} parent=1 // pred_check_branch
      %388 = sbr.rel (0) target = $region69
    $region68: #{tpu_custom_call.1} parent=1 // pred_region
      _
    $region69: #{tpu_custom_call.1} parent=1 // pred_fallthru
      _
    // Predicated region
    $region70: #{tpu_custom_call.1} parent=1 // pred_check
      _
    $region71: #{tpu_custom_call.1} parent=1 // pred_check_branch
      %390 = sbr.rel (0) target = $region73
    $region72: #{tpu_custom_call.1} parent=1 // pred_region
      %392 = vsyncadd [#allocation5], 0
      %s394 = sshll.u32 [#allocation6], 4
      %s395 = int_to_ptr.vmem [resolvable:$true] %s394
      %s396 = sshll.u32 %s17, 4
      %s397 = int_to_ptr.hbm [resolvable:$true] %s396
      %399 = dma.vmem_to_hbm [thread:$0]  %s395, 64, %s397, [#allocation5]
    $region73: #{tpu_custom_call.1} parent=1 // pred_fallthru
      _
    // Predicated region
    $region74: #{tpu_custom_call.1} parent=1 // pred_check
      _
    $region75: #{tpu_custom_call.1} parent=1 // pred_check_branch
      %401 = sbr.rel (0) target = $region77
    $region76: #{tpu_custom_call.1} parent=1 // pred_region
      %403 = vsyncadd [#allocation8], 0
      %s405 = sshll.u32 [#allocation7], 4
      %s406 = int_to_ptr.vmem [resolvable:$true] %s405
      %s407 = sshll.u32 %s18, 4
      %s408 = int_to_ptr.hbm [resolvable:$true] %s407
      %410 = dma.vmem_to_hbm [thread:$0]  %s406, 16, %s408, [#allocation8]
    $region77: #{tpu_custom_call.1} parent=1 // pred_fallthru
      _
    // Predicated region
    $region78: #{tpu_custom_call.1} parent=1 // pred_check
      _
    $region79: #{tpu_custom_call.1} parent=1 // pred_check_branch
      %412 = sbr.rel (0) target = $region81
    $region80: #{tpu_custom_call.1} parent=1 // pred_region
      _
    $region81: #{tpu_custom_call.1} parent=1 // pred_fallthru
      _
    // Predicated region
    $region82: #{tpu_custom_call.1} parent=1 // pred_check
      _
    $region83: #{tpu_custom_call.1} parent=1 // pred_check_branch
      %414 = sbr.rel (0) target = $region85
    $region84: #{tpu_custom_call.1} parent=1 // pred_region
      %416 = vsyncadd [#allocation8], 0
      %s418 = sshll.u32 [#allocation9], 4
      %s419 = int_to_ptr.vmem [resolvable:$true] %s418
      %s420 = sshll.u32 %s20, 4
      %s421 = int_to_ptr.hbm [resolvable:$true] %s420
      %423 = dma.vmem_to_hbm [thread:$0]  %s419, 16, %s421, [#allocation8]
    $region85: #{tpu_custom_call.1} parent=1 // pred_fallthru
      _
    // Predicated region
    $region86: #{tpu_custom_call.1} parent=1 // pred_check
      _
    $region87: #{tpu_custom_call.1} parent=1 // pred_check_branch
      %425 = sbr.rel (0) target = $region89
    $region88: #{tpu_custom_call.1} parent=1 // pred_region
      %427 = vsyncadd [#allocation11], 0
      %s428 = sshll.u32 [#allocation10], 4
      %s429 = int_to_ptr.vmem [resolvable:$true] %s428
      %s430 = sshll.u32 %s21, 4
      %s431 = int_to_ptr.hbm [resolvable:$true] %s430
      %436 = dma.vmem_to_hbm [thread:$0]  %s429, 256, %s431, [#allocation11], 128, 128, 8
    $region89: #{tpu_custom_call.1} parent=1 // pred_fallthru
      _
    // Predicated region
    $region90: #{tpu_custom_call.1} parent=1 // pred_check
      _
    $region91: #{tpu_custom_call.1} parent=1 // pred_check_branch
      %438 = sbr.rel (0) target = $region93
    $region92: #{tpu_custom_call.1} parent=1 // pred_region
      %440 = vsyncadd [#allocation11], 0
      %s442 = sshll.u32 [#allocation12], 4
      %s443 = int_to_ptr.vmem [resolvable:$true] %s442
      %s444 = sshll.u32 %s22, 4
      %s445 = int_to_ptr.hbm [resolvable:$true] %s444
      %447 = dma.vmem_to_hbm [thread:$0]  %s443, 16, %s445, [#allocation11]
    $region93: #{tpu_custom_call.1} parent=1 // pred_fallthru
      _
    // Predicated region
    $region94: #{tpu_custom_call.1} parent=1 // pred_check
      _
    $region95: #{tpu_custom_call.1} parent=1 // pred_check_branch
      %449 = sbr.rel (0) target = $region97
    $region96: #{tpu_custom_call.1} parent=1 // pred_region
      %451 = dma.done [#allocation3], 128
    $region97: #{tpu_custom_call.1} parent=1 // pred_fallthru
      _
    // Predicated region
    $region98: #{tpu_custom_call.1} parent=1 // pred_check
      _
    $region99: #{tpu_custom_call.1} parent=1 // pred_check_branch
      %453 = sbr.rel (0) target = $region101
    $region100: #{tpu_custom_call.1} parent=1 // pred_region
      %455 = dma.done [#allocation5], 128
    $region101: #{tpu_custom_call.1} parent=1 // pred_fallthru
      _
    // Predicated region
    $region102: #{tpu_custom_call.1} parent=1 // pred_check
      _
    $region103: #{tpu_custom_call.1} parent=1 // pred_check_branch
      %457 = sbr.rel (0) target = $region105
    $region104: #{tpu_custom_call.1} parent=1 // pred_region
      _
    $region105: #{tpu_custom_call.1} parent=1 // pred_fallthru
      _
    // Predicated region
    $region106: #{tpu_custom_call.1} parent=1 // pred_check
      _
    $region107: #{tpu_custom_call.1} parent=1 // pred_check_branch
      %459 = sbr.rel (0) target = $region109
    $region108: #{tpu_custom_call.1} parent=1 // pred_region
      %461 = dma.done [#allocation5], 64
    $region109: #{tpu_custom_call.1} parent=1 // pred_fallthru
      _
    // Predicated region
    $region110: #{tpu_custom_call.1} parent=1 // pred_check
      _
    $region111: #{tpu_custom_call.1} parent=1 // pred_check_branch
      %463 = sbr.rel (0) target = $region113
    $region112: #{tpu_custom_call.1} parent=1 // pred_region
      %465 = dma.done [#allocation8], 16
    $region113: #{tpu_custom_call.1} parent=1 // pred_fallthru
      _
    // Predicated region
    $region114: #{tpu_custom_call.1} parent=1 // pred_check
      _
    $region115: #{tpu_custom_call.1} parent=1 // pred_check_branch
      %467 = sbr.rel (0) target = $region117
    $region116: #{tpu_custom_call.1} parent=1 // pred_region
      _
    $region117: #{tpu_custom_call.1} parent=1 // pred_fallthru
      _
    // Predicated region
    $region118: #{tpu_custom_call.1} parent=1 // pred_check
      _
    $region119: #{tpu_custom_call.1} parent=1 // pred_check_branch
      %469 = sbr.rel (0) target = $region121
    $region120: #{tpu_custom_call.1} parent=1 // pred_region
      %471 = dma.done [#allocation8], 16
    $region121: #{tpu_custom_call.1} parent=1 // pred_fallthru
      _
    // Predicated region
    $region122: #{tpu_custom_call.1} parent=1 // pred_check
      _
    $region123: #{tpu_custom_call.1} parent=1 // pred_check_branch
      %473 = sbr.rel (0) target = $region125
    $region124: #{tpu_custom_call.1} parent=1 // pred_region
      %475 = dma.done [#allocation11], 256
    $region125: #{tpu_custom_call.1} parent=1 // pred_fallthru
      _
    // Predicated region
    $region126: #{tpu_custom_call.1} parent=1 // pred_check
      _
    $region127: #{tpu_custom_call.1} parent=1 // pred_check_branch
      %477 = sbr.rel (0) target = $region129
    $region128: #{tpu_custom_call.1} parent=1 // pred_region
      %479 = dma.done [#allocation11], 16
    $region129: #{tpu_custom_call.1} parent=1 // pred_fallthru
      _
    %480 = vsyncpa [#allocation3], 1
    %481 = vsyncpa [#allocation5], 1
    %482 = vsyncpa [#allocation8], 1
    %483 = vsyncpa [#allocation11], 1

</llo_original>
